<compile_context>
chip_gen: v6e
topology: v6e:2x2x1
jax: 0.10.0
libtpu: 0.0.40
codegen_flags: <defaults>
</compile_context>

<pallas_src>
import jax
import jax.numpy as jnp
from jax import lax
from jax.experimental import pallas as pl
from jax.experimental.pallas import tpu as pltpu


def _round_up(a, b):
    return (a + b - 1) // b * b


def ffn_kernel(x_ref, w1_ref, b1_ref, w2_ref, b2_ref, o_ref, acc_ref):
    # x_ref:  (tm, dim)        w1_ref: (dim, th)   b1_ref: (1, th)
    # w2_ref: (th, dim)        b2_ref: (1, dim)
    # o_ref:  (tm, dim)        acc_ref: (tm, dim) f32 scratch
    k = pl.program_id(1)

    @pl.when(k == 0)
    def _():
        # Fold the second Linear's bias into accumulator init (broadcast happens
        # once per output tile instead of once per hidden step).
        acc_ref[...] = jnp.broadcast_to(
            b2_ref[...].astype(jnp.float32), acc_ref.shape)

    # First Linear (hidden block): native-dtype operands, f32 accumulation on the MXU.
    h = jnp.dot(x_ref[...], w1_ref[...], preferred_element_type=jnp.float32)
    h = h + b1_ref[...].astype(jnp.float32)

    # Exact erf-based GELU (matches PyTorch nn.GELU() default). Elementwise, so
    # applying it per hidden block is exact.
    h = 0.5 * h * (1.0 + lax.erf(h * jnp.float32(0.7071067811865476)))

    # Second Linear (hidden block): accumulate into the f32 scratch.
    acc_ref[...] += jnp.dot(h.astype(w2_ref.dtype), w2_ref[...],
                            preferred_element_type=jnp.float32)

    @pl.when(k == pl.num_programs(1) - 1)
    def _():
        o_ref[...] = acc_ref[...].astype(o_ref.dtype)


def feed_forward(x, w1, b1, w2, b2, *, tm=256, th=512):
    """x: (..., dim). w1: (dim, hidden), b1: (hidden,), w2: (hidden, dim), b2: (dim,)."""
    orig_shape = x.shape
    dim = orig_shape[-1]
    hidden = w1.shape[1]

    x2d = x.reshape(-1, dim)
    n = x2d.shape[0]

    # ---- Row tiling: multiple of 8 sublanes; pad rows with zeros (sliced off after). ----
    tm = max(8, min(tm, _round_up(n, 8)))
    tm = _round_up(tm, 8)
    n_pad = _round_up(n, tm)
    if n_pad != n:
        x2d = jnp.pad(x2d, ((0, n_pad - n), (0, 0)))

    # ---- Hidden tiling: full hidden if small, else 128-aligned blocks; zero-pad hidden. ----
    if hidden <= th:
        th = hidden
        hidden_pad = hidden
    else:
        th = _round_up(min(th, hidden), 128)
        hidden_pad = _round_up(hidden, th)
    if hidden_pad != hidden:
        # GELU(0) = 0, so zero-padded hidden columns contribute nothing to the output.
        w1 = jnp.pad(w1, ((0, 0), (0, hidden_pad - hidden)))
        b1 = jnp.pad(b1, ((0, hidden_pad - hidden),))
        w2 = jnp.pad(w2, ((0, hidden_pad - hidden), (0, 0)))

    b1_2d = b1.reshape(1, hidden_pad)
    b2_2d = b2.reshape(1, dim)

    grid = (n_pad // tm, hidden_pad // th)

    # ---- VMEM budget (double-buffered inputs/outputs + f32 accumulator) with headroom. ----
    def _isz(a):
        return jnp.dtype(a.dtype).itemsize

    est = (2 * (tm * dim * _isz(x2d)
                + dim * th * _isz(w1)
                + th * _isz(b1_2d)
                + th * dim * _isz(w2)
                + dim * _isz(b2_2d))
           + 2 * tm * dim * _isz(x2d)     # output tile (double-buffered)
           + tm * dim * 4)                # f32 accumulator scratch
    vmem_limit = int(min(96 << 20, max(32 << 20, int(est * 1.5) + (2 << 20))))

    cost = pl.CostEstimate(
        flops=int(2 * 2 * n_pad * dim * hidden_pad),          # two matmuls
        transcendentals=int(n_pad * hidden_pad),               # erf per hidden activation
        bytes_accessed=int(x2d.size * _isz(x2d) + w1.size * _isz(w1)
                           + w2.size * _isz(w2) + n_pad * dim * _isz(x2d)),
    )

    out = pl.pallas_call(
        ffn_kernel,
        out_shape=jax.ShapeDtypeStruct((n_pad, dim), x.dtype),
        grid_spec=pltpu.PrefetchScalarGridSpec(
            num_scalar_prefetch=0,
            grid=grid,
            in_specs=[
                pl.BlockSpec((tm, dim), lambda i, k: (i, 0)),     # x row tile
                pl.BlockSpec((dim, th), lambda i, k: (0, k)),     # W1 hidden block
                pl.BlockSpec((1, th), lambda i, k: (0, k)),       # b1 hidden block
                pl.BlockSpec((th, dim), lambda i, k: (k, 0)),     # W2 hidden block
                pl.BlockSpec((1, dim), lambda i, k: (0, 0)),      # b2
            ],
            out_specs=pl.BlockSpec((tm, dim), lambda i, k: (i, 0)),
            scratch_shapes=[pltpu.VMEM((tm, dim), jnp.float32)],  # f32 accumulator
        ),
        compiler_params=pltpu.CompilerParams(
            dimension_semantics=("parallel", "arbitrary"),
            vmem_limit_bytes=vmem_limit,
        ),
        cost_estimate=cost,
    )(x2d, w1, b1_2d, w2, b2_2d)

    return out[:n].reshape(orig_shape)


def reference_ffn(x, w1, b1, w2, b2):
    h = jnp.dot(x, w1) + b1
    h = 0.5 * h * (1.0 + lax.erf(h / jnp.sqrt(2.0)))
    return jnp.dot(h, w2) + b2


if __name__ == "__main__":
    # Shapes implied by the module: x = (batch, seq, dim); dim -> hidden_dim -> dim.
    batch, seq, dim, hidden = 2, 8, 32, 64

    key = jax.random.PRNGKey(0)
    kx, kw1, kb1, kw2, kb2 = jax.random.split(key, 5)

    x = jax.random.normal(kx, (batch, seq, dim), dtype=jnp.float32)

    # PyTorch Linear stores weight as (out, in); we materialize it pre-transposed (in, out)
    # so the kernel computes x @ W, identical math to x @ weight.T.
    w1 = jax.random.normal(kw1, (dim, hidden), dtype=jnp.float32) * 0.05
    b1 = jax.random.normal(kb1, (hidden,), dtype=jnp.float32) * 0.05
    w2 = jax.random.normal(kw2, (hidden, dim), dtype=jnp.float32) * 0.05
    b2 = jax.random.normal(kb2, (dim,), dtype=jnp.float32) * 0.05

    out = feed_forward(x, w1, b1, w2, b2)
    out = jax.block_until_ready(out)

    ref = reference_ffn(x, w1, b1, w2, b2)
    assert out.shape == x.shape
    assert jnp.allclose(out, ref, atol=1e-5, rtol=1e-5), "mismatch vs reference"

    # Exercise the padded-row / tiled-hidden path too (rows not a multiple of the tile,
    # hidden larger than the default hidden tile).
    x_b = jax.random.normal(kx, (3, 100, 256), dtype=jnp.float32)
    kw1b, kw2b = jax.random.split(kw1)
    w1_b = jax.random.normal(kw1b, (256, 1024), dtype=jnp.float32) * 0.02
    b1_b = jnp.zeros((1024,), jnp.float32)
    w2_b = jax.random.normal(kw2b, (1024, 256), dtype=jnp.float32) * 0.02
    b2_b = jnp.zeros((256,), jnp.float32)
    out_b = jax.block_until_ready(feed_forward(x_b, w1_b, b1_b, w2_b, b2_b))
    ref_b = reference_ffn(x_b, w1_b, b1_b, w2_b, b2_b)
    assert jnp.allclose(out_b, ref_b, atol=2e-4, rtol=2e-4), "mismatch vs reference (tiled path)"

    print("KERNEL_OK")
</pallas_src>

<mosaic_0001>
module attributes {stable_mosaic.version = 11 : i64} {
  func.func @ffn_kernel(%arg0: i32, %arg1: i32, %arg2: memref<16x32xf32, #tpu.memory_space<vmem>>, %arg3: memref<32x64xf32, #tpu.memory_space<vmem>>, %arg4: memref<1x64xf32, #tpu.memory_space<vmem>>, %arg5: memref<64x32xf32, #tpu.memory_space<vmem>>, %arg6: memref<1x32xf32, #tpu.memory_space<vmem>>, %arg7: memref<16x32xf32, #tpu.memory_space<vmem>>, %arg8: memref<16x32xf32, #tpu.memory_space<vmem>>) attributes {dimension_semantics = [#tpu.dimension_semantics<parallel>, #tpu.dimension_semantics<arbitrary>], iteration_bounds = array<i64: 1, 1>, scalar_prefetch = 0 : i64, scratch_operands = 1 : i64, tpu.core_type = #tpu.core_type<tc>, window_params = [{transform_indices = @transform_0, window_bounds = array<i64: 16, 32>}, {transform_indices = @transform_1, window_bounds = array<i64: 32, 64>}, {transform_indices = @transform_2, window_bounds = array<i64: 1, 64>}, {transform_indices = @transform_3, window_bounds = array<i64: 64, 32>}, {pipeline_mode = #tpu.pipeline_mode<synchronous>, transform_indices = @transform_4, window_bounds = array<i64: 1, 32>}, {transform_indices = @transform_5, window_bounds = array<i64: 16, 32>}]} {
    %c0_i32 = arith.constant 0 : i32
    %0 = arith.cmpi eq, %arg1, %c0_i32 : i32
    %1 = arith.extui %0 : i1 to i32
    %c0_i32_0 = arith.constant 0 : i32
    %2 = arith.cmpi ne, %1, %c0_i32_0 : i32
    scf.if %2 {
      %c0_18 = arith.constant 0 : index
      %c0_19 = arith.constant 0 : index
      %25 = vector.load %arg6[%c0_18, %c0_19] : memref<1x32xf32, #tpu.memory_space<vmem>>, vector<1x32xf32>
      %26 = vector.shape_cast %25 : vector<1x32xf32> to vector<1x32xf32>
      %27 = vector.broadcast %26 : vector<1x32xf32> to vector<16x32xf32>
      %c0_20 = arith.constant 0 : index
      %c0_21 = arith.constant 0 : index
      %28 = vector.load %arg8[%c0_20, %c0_21] : memref<16x32xf32, #tpu.memory_space<vmem>>, vector<16x32xf32>
      tpu.vector_store %arg8[%c0_20, %c0_21], %27 {strides = array<i32>} : memref<16x32xf32, #tpu.memory_space<vmem>>, vector<16x32xf32>,
    } else {
    }
    %c0 = arith.constant 0 : index
    %c0_1 = arith.constant 0 : index
    %3 = vector.load %arg2[%c0, %c0_1] : memref<16x32xf32, #tpu.memory_space<vmem>>, vector<16x32xf32>
    %c0_2 = arith.constant 0 : index
    %c0_3 = arith.constant 0 : index
    %4 = vector.load %arg3[%c0_2, %c0_3] : memref<32x64xf32, #tpu.memory_space<vmem>>, vector<32x64xf32>
    %cst = arith.constant dense<0.000000e+00> : vector<16x64xf32>
    %5 = tpu.matmul %3, %4, %cst {dimension_numbers = #tpu.dot_dimension_numbers<[1], [0], [0], [1], [0, 0, 1, 1], [], []>} : vector<16x32xf32>, vector<32x64xf32>, vector<16x64xf32> -> vector<16x64xf32>
    %c0_4 = arith.constant 0 : index
    %c0_5 = arith.constant 0 : index
    %6 = vector.load %arg4[%c0_4, %c0_5] : memref<1x64xf32, #tpu.memory_space<vmem>>, vector<1x64xf32>
    %7 = vector.broadcast %6 : vector<1x64xf32> to vector<16x64xf32>
    %8 = arith.addf %5, %7 : vector<16x64xf32>
    %cst_6 = arith.constant 5.000000e-01 : f32
    %9 = vector.broadcast %cst_6 : f32 to vector<16x64xf32>
    %10 = arith.mulf %9, %8 : vector<16x64xf32>
    %cst_7 = arith.constant 0.707106769 : f32
    %11 = vector.broadcast %cst_7 : f32 to vector<16x64xf32>
    %12 = arith.mulf %8, %11 : vector<16x64xf32>
    %13 = math.erf %12 : vector<16x64xf32>
    %cst_8 = arith.constant 1.000000e+00 : f32
    %14 = vector.broadcast %cst_8 : f32 to vector<16x64xf32>
    %15 = arith.addf %14, %13 : vector<16x64xf32>
    %16 = arith.mulf %10, %15 : vector<16x64xf32>
    %c0_9 = arith.constant 0 : index
    %c0_10 = arith.constant 0 : index
    %17 = vector.load %arg8[%c0_9, %c0_10] : memref<16x32xf32, #tpu.memory_space<vmem>>, vector<16x32xf32>
    %c0_11 = arith.constant 0 : index
    %c0_12 = arith.constant 0 : index
    %18 = vector.load %arg5[%c0_11, %c0_12] : memref<64x32xf32, #tpu.memory_space<vmem>>, vector<64x32xf32>
    %cst_13 = arith.constant dense<0.000000e+00> : vector<16x32xf32>
    %19 = tpu.matmul %16, %18, %cst_13 {dimension_numbers = #tpu.dot_dimension_numbers<[1], [0], [0], [1], [0, 0, 1, 1], [], []>} : vector<16x64xf32>, vector<64x32xf32>, vector<16x32xf32> -> vector<16x32xf32>
    %20 = arith.addf %17, %19 : vector<16x32xf32>
    %c0_14 = arith.constant 0 : index
    %c0_15 = arith.constant 0 : index
    %21 = vector.load %arg8[%c0_14, %c0_15] : memref<16x32xf32, #tpu.memory_space<vmem>>, vector<16x32xf32>
    tpu.vector_store %arg8[%c0_14, %c0_15], %20 {strides = array<i32>} : memref<16x32xf32, #tpu.memory_space<vmem>>, vector<16x32xf32>,
    %c0_i32_16 = arith.constant 0 : i32
    %22 = arith.cmpi eq, %arg1, %c0_i32_16 : i32
    %23 = arith.extui %22 : i1 to i32
    %c0_i32_17 = arith.constant 0 : i32
    %24 = arith.cmpi ne, %23, %c0_i32_17 : i32
    scf.if %24 {
      %c0_18 = arith.constant 0 : index
      %c0_19 = arith.constant 0 : index
      %25 = vector.load %arg8[%c0_18, %c0_19] : memref<16x32xf32, #tpu.memory_space<vmem>>, vector<16x32xf32>
      %c0_20 = arith.constant 0 : index
      %c0_21 = arith.constant 0 : index
      %26 = vector.load %arg7[%c0_20, %c0_21] : memref<16x32xf32, #tpu.memory_space<vmem>>, vector<16x32xf32>
      tpu.vector_store %arg7[%c0_20, %c0_21], %25 {strides = array<i32>} : memref<16x32xf32, #tpu.memory_space<vmem>>, vector<16x32xf32>,
    } else {
    }
    return
  }
  func.func @transform_0(%arg0: i32, %arg1: i32) -> (i32, i32) {
    %c0_i32 = arith.constant 0 : i32
    %c0_i32_0 = arith.constant 0 : i32
    return %arg0, %c0_i32 : i32, i32
  }
  func.func @transform_1(%arg0: i32, %arg1: i32) -> (i32, i32) {
    %c0_i32 = arith.constant 0 : i32
    %c0_i32_0 = arith.constant 0 : i32
    return %c0_i32, %arg1 : i32, i32
  }
  func.func @transform_2(%arg0: i32, %arg1: i32) -> (i32, i32) {
    %c0_i32 = arith.constant 0 : i32
    %c0_i32_0 = arith.constant 0 : i32
    return %c0_i32, %arg1 : i32, i32
  }
  func.func @transform_3(%arg0: i32, %arg1: i32) -> (i32, i32) {
    %c0_i32 = arith.constant 0 : i32
    %c0_i32_0 = arith.constant 0 : i32
    return %arg1, %c0_i32 : i32, i32
  }
  func.func @transform_4(%arg0: i32, %arg1: i32) -> (i32, i32) {
    %c0_i32 = arith.constant 0 : i32
    %c0_i32_0 = arith.constant 0 : i32
    %c0_i32_1 = arith.constant 0 : i32
    return %c0_i32, %c0_i32_0 : i32, i32
  }
  func.func @transform_5(%arg0: i32, %arg1: i32) -> (i32, i32) {
    %c0_i32 = arith.constant 0 : i32
    %c0_i32_0 = arith.constant 0 : i32
    return %arg0, %c0_i32 : i32, i32
  }
}

</mosaic_0001>

<llo_original>
// kernel: tpu_custom_call.1
$region0: #{tpu_custom_call.1}
  #allocation0 [shape = 'u32[]', space=smem, size = 0x4, offset = 0x4, fixed_abs, tag = 'smem constant byte address 0x4 - core index']
  #allocation1 [shape = 'u32[144,128]{1,0:T(1,128)}', space=vmem, size = 0x12000, scoped, tag = 'internal scratch']
  #allocation2 [shape = 'f32[16,32]{1,0:T(8,128)}', space=vmem, size = 0x2000, scoped, tag = 'scratch operand']
  %s0 = inlined_call_operand.vmem [shape: f32[16,32], index: 0, kind: input, shape index: {}]
  %s1 = inlined_call_operand.vmem [shape: f32[32,64], index: 1, kind: input, shape index: {}]
  %s2 = inlined_call_operand.vmem [shape: f32[1,64], index: 2, kind: input, shape index: {}]
  %s3 = inlined_call_operand.vmem [shape: f32[64,32], index: 3, kind: input, shape index: {}]
  %s4 = inlined_call_operand.vmem [shape: f32[1,32], index: 4, kind: input, shape index: {}]
  %s5 = inlined_call_operand.hbm [shape: f32[16,32], index: 5, kind: output, shape index: {}]
  %s6 = sld [smem:[#allocation0]]
  $region38: #{tpu_custom_call.1} parent=0
    _
  %s8 = ssub.s32 1, %s6
  %s9 = scalar_select 0, %s8, %s6
  $region1: #{tpu_custom_call.1} parent=0
    #allocation3 [shape = 'u8[8192]{0}', space=vmem, size = 0x2000, scoped, tag = 'output window, operand 0, single buffered']
    #allocation4 [shape = 's32[1]{0}', space=sflag, size = 0x4, scoped, tag = 'scoped memory for tpu_custom_call.1']
    %10 = vsyncpa [#allocation4], 0
    // Predicated region
    $region2: #{tpu_custom_call.1} parent=1 // pred_check
      _
    $region3: #{tpu_custom_call.1} parent=1 // pred_check_branch
      %12 = sbr.rel (0) target = $region5
    $region4: #{tpu_custom_call.1} parent=1 // pred_region
      _
    $region5: #{tpu_custom_call.1} parent=1 // pred_fallthru
      _
    // Predicated region
    $region6: #{tpu_custom_call.1} parent=1 // pred_check
      _
    $region7: #{tpu_custom_call.1} parent=1 // pred_check_branch
      %14 = sbr.rel (0) target = $region9
    $region8: #{tpu_custom_call.1} parent=1 // pred_region
      _
    $region9: #{tpu_custom_call.1} parent=1 // pred_fallthru
      _
    // Predicated region
    $region10: #{tpu_custom_call.1} parent=1 // pred_check
      _
    $region11: #{tpu_custom_call.1} parent=1 // pred_check_branch
      %16 = sbr.rel (0) target = $region13
    $region12: #{tpu_custom_call.1} parent=1 // pred_region
      _
    $region13: #{tpu_custom_call.1} parent=1 // pred_fallthru
      _
    // Predicated region
    $region14: #{tpu_custom_call.1} parent=1 // pred_check
      _
    $region15: #{tpu_custom_call.1} parent=1 // pred_check_branch
      %18 = sbr.rel (0) target = $region17
    $region16: #{tpu_custom_call.1} parent=1 // pred_region
      _
    $region17: #{tpu_custom_call.1} parent=1 // pred_fallthru
      _
    // Predicated region
    $region18: #{tpu_custom_call.1} parent=1 // pred_check
      _
    $region19: #{tpu_custom_call.1} parent=1 // pred_check_branch
      %20 = sbr.rel (0) target = $region21
    $region20: #{tpu_custom_call.1} parent=1 // pred_region
      _
    $region21: #{tpu_custom_call.1} parent=1 // pred_fallthru
      _
    %p21 = scmp.eq.s32.totalorder 0, 0
    // Predicated region
    $region22: #{tpu_custom_call.1} parent=1 // pred_check
      %p22 = pneg %p21
    $region23: #{tpu_custom_call.1} parent=1 // pred_check_branch
      %24 = sbr.rel (%p22) target = $region25
    $region24: #{tpu_custom_call.1} parent=1 // pred_region
      %v25 = vld [vmem:[%s4] sm:$0x1]
      %v27 = vlaneseq
      %v28 = vshrl.u32 %v27, 7
      %v29 = vsub.s32 0, %v28
      %v30 = vrot.slane %v25, %v29
      %vm32 = vcmask 261120
      %33 = vst.msk [vmem:[#allocation2] sm:$0xff] %vm32, %v30
      %34 = vst.msk [vmem:[#allocation2 + $0x8] sm:$0xff] %vm32, %v30
    $region25: #{tpu_custom_call.1} parent=1 // pred_fallthru
      _
    %v35 = vld [vmem:[%s0] sm:$0xff]
    %v36 = vld [vmem:[%s0 + $0x8] sm:$0xff]
    %v37 = vld [vmem:[%s1] sm:$0xff]
    %v38 = vld [vmem:[%s1 + $0x8] sm:$0xff]
    %v39 = vld [vmem:[%s1 + $0x10] sm:$0xff]
    %v40 = vld [vmem:[%s1 + $0x18] sm:$0xff]
    %v41 = vld [vmem:[%s2] sm:$0x1]
    %v43 = vlaneseq
    %v44 = vshrl.u32 %v43, 7
    %v45 = vsub.s32 0, %v44
    %v46 = vrot.slane %v41, %v45
    %vm48 = vcmask 261120
    %v50 = vsel %vm48, %v35, 0
    %v53 = vsel %vm48, %v36, 0
    %55 = vmatprep.subr.mxu0 0.0
    %56 = vmatpush1.msra.mxu0 0.0
    %57 = vmatprep.subr.mxu0 0.0
    %58 = vmatpush1.msra.mxu0 0.0
    %59 = vmatprep.subr.mxu0 0.0
    %60 = vmatpush1.msra.mxu0 0.0
    %61 = vmatprep.subr.mxu0 0.0
    %62 = vmatpush1.msra.mxu0 0.0
    %63 = vmatprep.subr.mxu0 0.0
    %64 = vmatpush1.msra.mxu0 0.0
    %65 = vmatprep.subr.mxu0 0.0
    %66 = vmatpush1.msra.mxu0 0.0
    %67 = vmatprep.subr.mxu0 0.0
    %68 = vmatpush1.msra.mxu0 0.0
    %69 = vmatprep.subr.mxu0 0.0
    %70 = vmatpush1.msra.mxu0 0.0
    %71 = vmatprep.subr.mxu0 0.0
    %72 = vmatpush1.msra.mxu0 0.0
    %73 = vmatprep.subr.mxu0 0.0
    %74 = vmatpush1.msra.mxu0 0.0
    %75 = vmatprep.subr.mxu0 0.0
    %76 = vmatpush1.msra.mxu0 0.0
    %77 = vmatprep.subr.mxu0 0.0
    %78 = vmatpush1.msra.mxu0 0.0
    %79 = vmatprep.subr.mxu0 0.0
    %80 = vmatpush1.msra.mxu0 %v40
    %81 = vmatprep.subr.mxu0 0.0
    %82 = vmatpush1.msra.mxu0 %v39
    %83 = vmatprep.subr.mxu0 0.0
    %84 = vmatpush1.msra.mxu0 %v38
    %85 = vmatprep.subr.mxu0 0.0
    %86 = vmatpush1.msra.mxu0 %v37
    %87 = vmatprep.subr.mxu0 0.0
    %88 = vmatpush2.msra.mxu0 0.0
    %89 = vmatprep.subr.mxu0 0.0
    %90 = vmatpush2.msra.mxu0 0.0
    %91 = vmatprep.subr.mxu0 0.0
    %92 = vmatpush2.msra.mxu0 0.0
    %93 = vmatprep.subr.mxu0 0.0
    %94 = vmatpush2.msra.mxu0 0.0
    %95 = vmatprep.subr.mxu0 0.0
    %96 = vmatpush2.msra.mxu0 0.0
    %97 = vmatprep.subr.mxu0 0.0
    %98 = vmatpush2.msra.mxu0 0.0
    %99 = vmatprep.subr.mxu0 0.0
    %100 = vmatpush2.msra.mxu0 0.0
    %101 = vmatprep.subr.mxu0 0.0
    %102 = vmatpush2.msra.mxu0 0.0
    %103 = vmatprep.subr.mxu0 0.0
    %104 = vmatpush2.msra.mxu0 0.0
    %105 = vmatprep.subr.mxu0 0.0
    %106 = vmatpush2.msra.mxu0 0.0
    %107 = vmatprep.subr.mxu0 0.0
    %108 = vmatpush2.msra.mxu0 0.0
    %109 = vmatprep.subr.mxu0 0.0
    %110 = vmatpush2.msra.mxu0 0.0
    %111 = vmatprep.subr.mxu0 0.0
    %112 = vmatpush2.msra.mxu0 0.0
    %113 = vmatprep.subr.mxu0 0.0
    %114 = vmatpush2.msra.mxu0 0.0
    %115 = vmatprep.subr.mxu0 0.0
    %116 = vmatpush2.msra.mxu0 0.0
    %117 = vmatprep.subr.mxu0 0.0
    %118 = vmatpush2.msra.mxu0 0.0
    %119 = vmatprep.mubr.f32.mxu0 0.0
    %120 = vmatmul.mubr.f32.gmra.mxu0 %v50
    %v121 = vpop.f32.mrf.mxu0
    %v122 = vadd.f32 %v46, %v121
    %v123 = vpop.f32.mrf.mxu0
    %124 = vmatprep.mubr.f32.mxu0 0.0
    %125 = vmatmul.mubr.f32.gmra.mxu0 %v53
    %v126 = vpop.f32.mrf.mxu0
    %v127 = vadd.f32 %v46, %v126
    %v128 = vpop.f32.mrf.mxu0
    %129 = vdwg.mxu0
    %v130 = vmul.f32 %v122, 0.5
    %v131 = vmul.f32 %v127, 0.5
    %v132 = vmul.f32 %v122, 0.70710677
    %v133 = vmul.f32 %v127, 0.70710677
    %v134 = verf.f32.pop %v132
    %v135 = verf.f32.pop %v133
    %v136 = vadd.f32 %v134, 1.0
    %v137 = vadd.f32 %v135, 1.0
    %v138 = vmul.f32 %v130, %v136
    %v139 = vmul.f32 %v131, %v137
    %v140 = vld [vmem:[#allocation2] sm:$0xff]
    %v141 = vld [vmem:[#allocation2 + $0x8] sm:$0xff]
    %v142 = vld [vmem:[%s3] sm:$0xff]
    %v143 = vld [vmem:[%s3 + $0x8] sm:$0xff]
    %v144 = vld [vmem:[%s3 + $0x10] sm:$0xff]
    %v145 = vld [vmem:[%s3 + $0x18] sm:$0xff]
    %v146 = vld [vmem:[%s3 + $0x20] sm:$0xff]
    %v147 = vld [vmem:[%s3 + $0x28] sm:$0xff]
    %v148 = vld [vmem:[%s3 + $0x30] sm:$0xff]
    %v149 = vld [vmem:[%s3 + $0x38] sm:$0xff]
    %vm150 = vcmask 523264
    %v152 = vsel %vm150, %v138, 0
    %v155 = vsel %vm150, %v139, 0
    %157 = vmatprep.subr.mxu0 0.0
    %158 = vmatpush1.msra.mxu0 0.0
    %159 = vmatprep.subr.mxu0 0.0
    %160 = vmatpush1.msra.mxu0 0.0
    %161 = vmatprep.subr.mxu0 0.0
    %162 = vmatpush1.msra.mxu0 0.0
    %163 = vmatprep.subr.mxu0 0.0
    %164 = vmatpush1.msra.mxu0 0.0
    %165 = vmatprep.subr.mxu0 0.0
    %166 = vmatpush1.msra.mxu0 0.0
    %167 = vmatprep.subr.mxu0 0.0
    %168 = vmatpush1.msra.mxu0 0.0
    %169 = vmatprep.subr.mxu0 0.0
    %170 = vmatpush1.msra.mxu0 0.0
    %171 = vmatprep.subr.mxu0 0.0
    %172 = vmatpush1.msra.mxu0 0.0
    %173 = vmatprep.subr.mxu0 0.0
    %174 = vmatpush1.msra.mxu0 %v149
    %175 = vmatprep.subr.mxu0 0.0
    %176 = vmatpush1.msra.mxu0 %v148
    %177 = vmatprep.subr.mxu0 0.0
    %178 = vmatpush1.msra.mxu0 %v147
    %179 = vmatprep.subr.mxu0 0.0
    %180 = vmatpush1.msra.mxu0 %v146
    %181 = vmatprep.subr.mxu0 0.0
    %182 = vmatpush1.msra.mxu0 %v145
    %183 = vmatprep.subr.mxu0 0.0
    %184 = vmatpush1.msra.mxu0 %v144
    %185 = vmatprep.subr.mxu0 0.0
    %186 = vmatpush1.msra.mxu0 %v143
    %187 = vmatprep.subr.mxu0 0.0
    %188 = vmatpush1.msra.mxu0 %v142
    %189 = vmatprep.subr.mxu0 0.0
    %190 = vmatpush2.msra.mxu0 0.0
    %191 = vmatprep.subr.mxu0 0.0
    %192 = vmatpush2.msra.mxu0 0.0
    %193 = vmatprep.subr.mxu0 0.0
    %194 = vmatpush2.msra.mxu0 0.0
    %195 = vmatprep.subr.mxu0 0.0
    %196 = vmatpush2.msra.mxu0 0.0
    %197 = vmatprep.subr.mxu0 0.0
    %198 = vmatpush2.msra.mxu0 0.0
    %199 = vmatprep.subr.mxu0 0.0
    %200 = vmatpush2.msra.mxu0 0.0
    %201 = vmatprep.subr.mxu0 0.0
    %202 = vmatpush2.msra.mxu0 0.0
    %203 = vmatprep.subr.mxu0 0.0
    %204 = vmatpush2.msra.mxu0 0.0
    %205 = vmatprep.subr.mxu0 0.0
    %206 = vmatpush2.msra.mxu0 0.0
    %207 = vmatprep.subr.mxu0 0.0
    %208 = vmatpush2.msra.mxu0 0.0
    %209 = vmatprep.subr.mxu0 0.0
    %210 = vmatpush2.msra.mxu0 0.0
    %211 = vmatprep.subr.mxu0 0.0
    %212 = vmatpush2.msra.mxu0 0.0
    %213 = vmatprep.subr.mxu0 0.0
    %214 = vmatpush2.msra.mxu0 0.0
    %215 = vmatprep.subr.mxu0 0.0
    %216 = vmatpush2.msra.mxu0 0.0
    %217 = vmatprep.subr.mxu0 0.0
    %218 = vmatpush2.msra.mxu0 0.0
    %219 = vmatprep.subr.mxu0 0.0
    %220 = vmatpush2.msra.mxu0 0.0
    %221 = vmatprep.mubr.f32.mxu0 0.0
    %222 = vmatmul.mubr.f32.gmra.mxu0 %v152
    %v223 = vpop.f32.mrf.mxu0
    %v224 = vadd.f32 0.0, %v223
    %v225 = vpop.f32.mrf.mxu0
    %226 = vmatprep.mubr.f32.mxu0 0.0
    %227 = vmatmul.mubr.f32.gmra.mxu0 %v155
    %v228 = vpop.f32.mrf.mxu0
    %v229 = vadd.f32 0.0, %v228
    %v230 = vpop.f32.mrf.mxu0
    %231 = vdwg.mxu0
    %v232 = vadd.f32 %v140, %v224
    %v233 = vadd.f32 %v141, %v229
    %234 = vst.msk [vmem:[#allocation2] sm:$0xff] %vm48, %v232
    %235 = vst.msk [vmem:[#allocation2 + $0x8] sm:$0xff] %vm48, %v233
    // Predicated region
    $region26: #{tpu_custom_call.1} parent=1 // pred_check
      %p236 = pneg %p21
    $region27: #{tpu_custom_call.1} parent=1 // pred_check_branch
      %238 = sbr.rel (%p236) target = $region29
    $region28: #{tpu_custom_call.1} parent=1 // pred_region
      %v239 = vld [vmem:[#allocation2] sm:$0xff]
      %v240 = vld [vmem:[#allocation2 + $0x8] sm:$0xff]
      %241 = vst.msk [vmem:[#allocation3] sm:$0xff] %vm48, %v239
      %242 = vst.msk [vmem:[#allocation3 + $0x8] sm:$0xff] %vm48, %v240
    $region29: #{tpu_custom_call.1} parent=1 // pred_fallthru
      _
    // Predicated region
    $region30: #{tpu_custom_call.1} parent=1 // pred_check
      _
    $region31: #{tpu_custom_call.1} parent=1 // pred_check_branch
      %244 = sbr.rel (0) target = $region33
    $region32: #{tpu_custom_call.1} parent=1 // pred_region
      %s246 = ssub.s32 256, 256
      %247 = vsyncadd [#allocation4], %s246
      %s248 = sshll.u32 [#allocation3], 4
      %s249 = int_to_ptr.vmem [resolvable:$true] %s248
      %254 = dma.vmem_to_hbm [thread:$0]  %s249, 256, %s5, [#allocation4], 128, 128, 8
    $region33: #{tpu_custom_call.1} parent=1 // pred_fallthru
      _
    // Predicated region
    $region34: #{tpu_custom_call.1} parent=1 // pred_check
      _
    $region35: #{tpu_custom_call.1} parent=1 // pred_check_branch
      %256 = sbr.rel (0) target = $region37
    $region36: #{tpu_custom_call.1} parent=1 // pred_region
      %257 = dma.done [#allocation4], 256
    $region37: #{tpu_custom_call.1} parent=1 // pred_fallthru
      _
    %258 = vsyncpa [#allocation4], 1

</llo_original>
